<compile_context>
chip_gen: v5e
topology: v5e:2x2
jax: 0.10.0
libtpu: 0.0.40
codegen_flags: <defaults>
</compile_context>

<pallas_src>
import numpy as np
import jax
import jax.numpy as jnp
from jax import lax
from jax.experimental import pallas as pl
from jax.experimental.pallas import tpu as pltpu


# ------------------------------- Pallas kernel -------------------------------

def _recon_kernel(feat_ref, lrd_ref, wcol_ref, wup_ref, bias_ref, out_ref):
    # Per grid step (one image):
    #   feat_ref : (1, 64, (H+3)*Wpp) bf16  zero-padded features, NCHW, flat spatial
    #   lrd_ref  : (1, 1, (H+4)*Wpp)  f32   zero-dilated + zero-padded LR, flat
    #   wcol_ref : (9, 64)            bf16  collapse weights, taps x channels
    #   wup_ref  : (16,)              f32   SMEM, flipped 4x4 bilinear kernel, flat
    #   bias_ref : (1,)               f32   SMEM, b_collapse + b_upsample
    #   out_ref  : (1, 1, H*Wpp)      f32   flat padded-pitch output rows
    L = out_ref.shape[-1]                    # H * Wpp
    Sf = feat_ref.shape[-1]                  # (H+3) * Wpp
    Wpp = (Sf - L) // 3                      # unified flat row pitch (= W+3)

    # --- 64-channel reduction for all nine 3x3 taps: one bf16 MXU matmul -----
    taps = jnp.dot(wcol_ref[...], feat_ref[0],
                   preferred_element_type=jnp.float32)        # (9, Sf) f32

    # --- 3x3 collapse: flat lane-dense shifted adds (offset kh*Wpp + kw) -----
    # acc[j = y*Wpp + x] is exact for x < W; x >= W columns are garbage and
    # are dropped in the wrapper.
    acc = taps[0:1, 0:L] + bias_ref[0]       # tap (0,0) + fused bias
    for kh in range(3):
        for kw in range(3):
            if kh == 0 and kw == 0:
                continue
            t = kh * 3 + kw
            off = kh * Wpp + kw
            acc = acc + taps[t:t + 1, off:off + L]

    # --- ConvTranspose2d(1,1,4x4,stride 2,pad 1) as a flat stride-1 4x4
    #     correlation over the zero-dilated LR slab (same pitch Wpp) ----------
    lrd = lrd_ref[0]                         # (1, (H+4)*Wpp)
    for kh in range(4):
        for kw in range(4):
            off = kh * Wpp + kw
            acc = acc + lrd[:, off:off + L] * wup_ref[kh * 4 + kw]

    out_ref[0] = acc


# --------------------------------- wrapper -----------------------------------

def ms_image_reconstruction(features, LR, w_col, b_col, w_up, b_up):
    """features: (N,64,H,W) NCHW; LR: (N,1,H/2,W/2) NCHW.  Returns (N,1,H,W)."""
    N, C, H, W = features.shape
    _, _, Hl, Wl = LR.shape
    assert H == 2 * Hl and W == 2 * Wl and C == 64

    Wpp = W + 3                      # unified flat row pitch
    Sf = (H + 3) * Wpp               # padded features: pad (1,2) rows, (1,2) cols
    Lu = (H + 4) * Wpp               # padded dilated LR: pad (2,3) rows, (2,2) cols
    L = H * Wpp                      # flat accumulator / output length per image

    # Features: halo pad (top/left 1, bottom/right 2 -> extra rows/cols are zero
    # and never read for valid outputs), flatten spatial, cast to bf16 for a
    # single-pass MXU matmul and half the DMA bytes.
    feat_pad = jnp.pad(features.astype(jnp.bfloat16),
                       ((0, 0), (0, 0), (1, 2), (1, 2))).reshape(N, C, Sf)

    # LR: zero-dilate (stride 2) and pad to the same pitch Wpp.
    lr = LR[:, 0].astype(jnp.float32)                              # (N, Hl, Wl)
    lr_dil = jnp.zeros((N, 2 * Hl - 1, 2 * Wl - 1), jnp.float32)
    lr_dil = lr_dil.at[:, ::2, ::2].set(lr)
    lr_pad = jnp.pad(lr_dil, ((0, 0), (2, 3), (2, 2))).reshape(N, 1, Lu)

    # Collapse weights as (9, 64): row = 3*kh + kw, column = channel.
    w_mat = jnp.transpose(w_col[0], (1, 2, 0)).reshape(9, C).astype(jnp.bfloat16)
    # ConvTranspose weight (1,1,4,4): spatially flipped for the forward form.
    w_up_flip = w_up[0, 0, ::-1, ::-1].reshape(-1).astype(jnp.float32)   # (16,)
    # Fold the two biases into one scalar added once.
    bias = (b_col[0] + b_up[0]).reshape(1).astype(jnp.float32)           # (1,)

    out_flat = pl.pallas_call(
        _recon_kernel,
        out_shape=jax.ShapeDtypeStruct((N, 1, L), jnp.float32),
        grid=(N,),
        in_specs=[
            pl.BlockSpec((1, C, Sf), lambda n: (n, 0, 0)),               # features
            pl.BlockSpec((1, 1, Lu), lambda n: (n, 0, 0)),               # dilated LR
            pl.BlockSpec((9, C), lambda n: (0, 0)),                      # (9,64) w
            pl.BlockSpec(memory_space=pltpu.MemorySpace.SMEM),           # 4x4 scalars
            pl.BlockSpec(memory_space=pltpu.MemorySpace.SMEM),           # fused bias
        ],
        out_specs=pl.BlockSpec((1, 1, L), lambda n: (n, 0, 0)),
        compiler_params=pltpu.CompilerParams(
            dimension_semantics=("parallel",)),                          # 2 TCs on v7x
    )(feat_pad, lr_pad, w_mat, w_up_flip, bias)

    # Free layout plumbing in XLA: drop the padded columns, restore NCHW.
    return out_flat.reshape(N, H, Wpp)[:, :, :W].reshape(N, 1, H, W)


# ------------------------- deterministic parameter init ----------------------

def upsample_filt(size):
    factor = (size + 1) // 2
    if size % 2 == 1:
        center = factor - 1
    else:
        center = factor - 0.5
    og = np.ogrid[:size, :size]
    return (1 - abs(og[0] - center) / factor) * (1 - abs(og[1] - center) / factor)


def init_params():
    key = jax.random.PRNGKey(0)
    k1, k2, k3 = jax.random.split(key, 3)
    # collapse: Conv2d(64, 1, 3x3) -> weight (1,64,3,3), bias (1,)
    w_col = jax.random.normal(k1, (1, 64, 3, 3), jnp.float32) * 0.05
    b_col = jax.random.normal(k2, (1,), jnp.float32) * 0.01
    # upsample: ConvTranspose2d(1, 1, 4x4) -> weight (1,1,4,4) = bilinear kernel
    w_up = jnp.asarray(upsample_filt(4), jnp.float32).reshape(1, 1, 4, 4)
    b_up = jax.random.normal(k3, (1,), jnp.float32) * 0.01
    return w_col, b_col, w_up, b_up


# --------------------------------- reference ----------------------------------

def reference(features, LR, w_col, b_col, w_up, b_up):
    col = lax.conv_general_dilated(
        features, w_col, window_strides=(1, 1), padding=((1, 1), (1, 1)),
        dimension_numbers=('NCHW', 'OIHW', 'NCHW'),
        precision=lax.Precision.HIGHEST) + b_col[0]
    w_t = jnp.transpose(w_up, (1, 0, 2, 3))[:, :, ::-1, ::-1]
    up = lax.conv_general_dilated(
        LR, w_t, window_strides=(1, 1), padding=((2, 2), (2, 2)),
        lhs_dilation=(2, 2), dimension_numbers=('NCHW', 'OIHW', 'NCHW'),
        precision=lax.Precision.HIGHEST) + b_up[0]
    return col + up


# ----------------------------------- main -------------------------------------

if __name__ == "__main__":
    key = jax.random.PRNGKey(0)
    kf, kl = jax.random.split(key)
    N, C, H, W = 2, 64, 16, 16
    features = jax.random.normal(kf, (N, C, H, W), jnp.float32)
    LR = jax.random.normal(kl, (N, 1, H // 2, W // 2), jnp.float32)

    w_col, b_col, w_up, b_up = init_params()

    out = ms_image_reconstruction(features, LR, w_col, b_col, w_up, b_up)
    out = jax.block_until_ready(out)
    assert out.shape == (N, 1, H, W)

    # (1) True-f32 module semantics; loose tolerance covers the single-pass
    #     bf16 MXU channel reduction (estimated worst-case abs err ~1e-2 here).
    ref = jax.block_until_ready(reference(features, LR, w_col, b_col, w_up, b_up))
    np.testing.assert_allclose(np.asarray(out), np.asarray(ref),
                               rtol=2e-2, atol=2e-2)

    # (2) Structural exactness: reference whose collapse inputs see the same
    #     bf16 rounding the MXU sees (accumulation still f32) -> tight check.
    feat_r = features.astype(jnp.bfloat16).astype(jnp.float32)
    wcol_r = w_col.astype(jnp.bfloat16).astype(jnp.float32)
    ref_bf = jax.block_until_ready(reference(feat_r, LR, wcol_r, b_col, w_up, b_up))
    np.testing.assert_allclose(np.asarray(out), np.asarray(ref_bf),
                               rtol=1e-3, atol=1e-3)

    print("KERNEL_OK")
</pallas_src>

<mosaic_0001>
module attributes {stable_mosaic.version = 11 : i64} {
  func.func @_recon_kernel(%arg0: i32, %arg1: memref<1x64x361xbf16, #tpu.memory_space<vmem>>, %arg2: memref<1x1x380xf32, #tpu.memory_space<vmem>>, %arg3: memref<9x64xbf16, #tpu.memory_space<vmem>>, %arg4: memref<16xf32, #tpu.memory_space<smem>>, %arg5: memref<1xf32, #tpu.memory_space<smem>>, %arg6: memref<1x1x304xf32, #tpu.memory_space<vmem>>) attributes {dimension_semantics = [#tpu.dimension_semantics<parallel>], iteration_bounds = array<i64: 2>, scalar_prefetch = 0 : i64, scratch_operands = 0 : i64, tpu.core_type = #tpu.core_type<tc>, window_params = [{transform_indices = @transform_0, window_bounds = array<i64: 1, 64, 361>}, {transform_indices = @transform_1, window_bounds = array<i64: 1, 1, 380>}, {pipeline_mode = #tpu.pipeline_mode<synchronous>, transform_indices = @transform_2, window_bounds = array<i64: 9, 64>}, {transform_indices = @transform_3, window_bounds = array<i64: 16>}, {transform_indices = @transform_4, window_bounds = array<i64: 1>}, {transform_indices = @transform_5, window_bounds = array<i64: 1, 1, 304>}]} {
    %c0 = arith.constant 0 : index
    %c0_0 = arith.constant 0 : index
    %0 = vector.load %arg3[%c0, %c0_0] : memref<9x64xbf16, #tpu.memory_space<vmem>>, vector<9x64xbf16>
    %c0_1 = arith.constant 0 : index
    %c0_2 = arith.constant 0 : index
    %c0_3 = arith.constant 0 : index
    %1 = vector.load %arg1[%c0_1, %c0_2, %c0_3] : memref<1x64x361xbf16, #tpu.memory_space<vmem>>, vector<1x64x361xbf16>
    %2 = vector.shape_cast %1 : vector<1x64x361xbf16> to vector<64x361xbf16>
    %cst = arith.constant dense<0.000000e+00> : vector<9x361xf32>
    %3 = tpu.matmul %0, %2, %cst {dimension_numbers = #tpu.dot_dimension_numbers<[1], [0], [0], [1], [0, 0, 1, 1], [], []>} : vector<9x64xbf16>, vector<64x361xbf16>, vector<9x361xf32> -> vector<9x361xf32>
    %4 = vector.extract_strided_slice %3 {offsets = [0, 0], sizes = [1, 304], strides = [1, 1]} : vector<9x361xf32> to vector<1x304xf32>
    %c0_4 = arith.constant 0 : index
    %5 = memref.load %arg5[%c0_4] : memref<1xf32, #tpu.memory_space<smem>>
    %6 = vector.broadcast %5 : f32 to vector<1x304xf32>
    %7 = arith.addf %4, %6 : vector<1x304xf32>
    %8 = vector.extract_strided_slice %3 {offsets = [1, 1], sizes = [1, 304], strides = [1, 1]} : vector<9x361xf32> to vector<1x304xf32>
    %9 = arith.addf %7, %8 : vector<1x304xf32>
    %10 = vector.extract_strided_slice %3 {offsets = [2, 2], sizes = [1, 304], strides = [1, 1]} : vector<9x361xf32> to vector<1x304xf32>
    %11 = arith.addf %9, %10 : vector<1x304xf32>
    %12 = vector.extract_strided_slice %3 {offsets = [3, 19], sizes = [1, 304], strides = [1, 1]} : vector<9x361xf32> to vector<1x304xf32>
    %13 = arith.addf %11, %12 : vector<1x304xf32>
    %14 = vector.extract_strided_slice %3 {offsets = [4, 20], sizes = [1, 304], strides = [1, 1]} : vector<9x361xf32> to vector<1x304xf32>
    %15 = arith.addf %13, %14 : vector<1x304xf32>
    %16 = vector.extract_strided_slice %3 {offsets = [5, 21], sizes = [1, 304], strides = [1, 1]} : vector<9x361xf32> to vector<1x304xf32>
    %17 = arith.addf %15, %16 : vector<1x304xf32>
    %18 = vector.extract_strided_slice %3 {offsets = [6, 38], sizes = [1, 304], strides = [1, 1]} : vector<9x361xf32> to vector<1x304xf32>
    %19 = arith.addf %17, %18 : vector<1x304xf32>
    %20 = vector.extract_strided_slice %3 {offsets = [7, 39], sizes = [1, 304], strides = [1, 1]} : vector<9x361xf32> to vector<1x304xf32>
    %21 = arith.addf %19, %20 : vector<1x304xf32>
    %22 = vector.extract_strided_slice %3 {offsets = [8, 40], sizes = [1, 304], strides = [1, 1]} : vector<9x361xf32> to vector<1x304xf32>
    %23 = arith.addf %21, %22 : vector<1x304xf32>
    %c0_5 = arith.constant 0 : index
    %c0_6 = arith.constant 0 : index
    %c0_7 = arith.constant 0 : index
    %24 = vector.load %arg2[%c0_5, %c0_6, %c0_7] : memref<1x1x380xf32, #tpu.memory_space<vmem>>, vector<1x1x380xf32>
    %25 = vector.shape_cast %24 : vector<1x1x380xf32> to vector<1x380xf32>
    %26 = vector.extract_strided_slice %25 {offsets = [0, 0], sizes = [1, 304], strides = [1, 1]} : vector<1x380xf32> to vector<1x304xf32>
    %c0_8 = arith.constant 0 : index
    %27 = memref.load %arg4[%c0_8] : memref<16xf32, #tpu.memory_space<smem>>
    %28 = vector.broadcast %27 : f32 to vector<1x304xf32>
    %29 = arith.mulf %26, %28 : vector<1x304xf32>
    %30 = arith.addf %23, %29 : vector<1x304xf32>
    %31 = vector.extract_strided_slice %25 {offsets = [0, 1], sizes = [1, 304], strides = [1, 1]} : vector<1x380xf32> to vector<1x304xf32>
    %c1 = arith.constant 1 : index
    %32 = memref.load %arg4[%c1] : memref<16xf32, #tpu.memory_space<smem>>
    %33 = vector.broadcast %32 : f32 to vector<1x304xf32>
    %34 = arith.mulf %31, %33 : vector<1x304xf32>
    %35 = arith.addf %30, %34 : vector<1x304xf32>
    %36 = vector.extract_strided_slice %25 {offsets = [0, 2], sizes = [1, 304], strides = [1, 1]} : vector<1x380xf32> to vector<1x304xf32>
    %c2 = arith.constant 2 : index
    %37 = memref.load %arg4[%c2] : memref<16xf32, #tpu.memory_space<smem>>
    %38 = vector.broadcast %37 : f32 to vector<1x304xf32>
    %39 = arith.mulf %36, %38 : vector<1x304xf32>
    %40 = arith.addf %35, %39 : vector<1x304xf32>
    %41 = vector.extract_strided_slice %25 {offsets = [0, 3], sizes = [1, 304], strides = [1, 1]} : vector<1x380xf32> to vector<1x304xf32>
    %c3 = arith.constant 3 : index
    %42 = memref.load %arg4[%c3] : memref<16xf32, #tpu.memory_space<smem>>
    %43 = vector.broadcast %42 : f32 to vector<1x304xf32>
    %44 = arith.mulf %41, %43 : vector<1x304xf32>
    %45 = arith.addf %40, %44 : vector<1x304xf32>
    %46 = vector.extract_strided_slice %25 {offsets = [0, 19], sizes = [1, 304], strides = [1, 1]} : vector<1x380xf32> to vector<1x304xf32>
    %c4 = arith.constant 4 : index
    %47 = memref.load %arg4[%c4] : memref<16xf32, #tpu.memory_space<smem>>
    %48 = vector.broadcast %47 : f32 to vector<1x304xf32>
    %49 = arith.mulf %46, %48 : vector<1x304xf32>
    %50 = arith.addf %45, %49 : vector<1x304xf32>
    %51 = vector.extract_strided_slice %25 {offsets = [0, 20], sizes = [1, 304], strides = [1, 1]} : vector<1x380xf32> to vector<1x304xf32>
    %c5 = arith.constant 5 : index
    %52 = memref.load %arg4[%c5] : memref<16xf32, #tpu.memory_space<smem>>
    %53 = vector.broadcast %52 : f32 to vector<1x304xf32>
    %54 = arith.mulf %51, %53 : vector<1x304xf32>
    %55 = arith.addf %50, %54 : vector<1x304xf32>
    %56 = vector.extract_strided_slice %25 {offsets = [0, 21], sizes = [1, 304], strides = [1, 1]} : vector<1x380xf32> to vector<1x304xf32>
    %c6 = arith.constant 6 : index
    %57 = memref.load %arg4[%c6] : memref<16xf32, #tpu.memory_space<smem>>
    %58 = vector.broadcast %57 : f32 to vector<1x304xf32>
    %59 = arith.mulf %56, %58 : vector<1x304xf32>
    %60 = arith.addf %55, %59 : vector<1x304xf32>
    %61 = vector.extract_strided_slice %25 {offsets = [0, 22], sizes = [1, 304], strides = [1, 1]} : vector<1x380xf32> to vector<1x304xf32>
    %c7 = arith.constant 7 : index
    %62 = memref.load %arg4[%c7] : memref<16xf32, #tpu.memory_space<smem>>
    %63 = vector.broadcast %62 : f32 to vector<1x304xf32>
    %64 = arith.mulf %61, %63 : vector<1x304xf32>
    %65 = arith.addf %60, %64 : vector<1x304xf32>
    %66 = vector.extract_strided_slice %25 {offsets = [0, 38], sizes = [1, 304], strides = [1, 1]} : vector<1x380xf32> to vector<1x304xf32>
    %c8 = arith.constant 8 : index
    %67 = memref.load %arg4[%c8] : memref<16xf32, #tpu.memory_space<smem>>
    %68 = vector.broadcast %67 : f32 to vector<1x304xf32>
    %69 = arith.mulf %66, %68 : vector<1x304xf32>
    %70 = arith.addf %65, %69 : vector<1x304xf32>
    %71 = vector.extract_strided_slice %25 {offsets = [0, 39], sizes = [1, 304], strides = [1, 1]} : vector<1x380xf32> to vector<1x304xf32>
    %c9 = arith.constant 9 : index
    %72 = memref.load %arg4[%c9] : memref<16xf32, #tpu.memory_space<smem>>
    %73 = vector.broadcast %72 : f32 to vector<1x304xf32>
    %74 = arith.mulf %71, %73 : vector<1x304xf32>
    %75 = arith.addf %70, %74 : vector<1x304xf32>
    %76 = vector.extract_strided_slice %25 {offsets = [0, 40], sizes = [1, 304], strides = [1, 1]} : vector<1x380xf32> to vector<1x304xf32>
    %c10 = arith.constant 10 : index
    %77 = memref.load %arg4[%c10] : memref<16xf32, #tpu.memory_space<smem>>
    %78 = vector.broadcast %77 : f32 to vector<1x304xf32>
    %79 = arith.mulf %76, %78 : vector<1x304xf32>
    %80 = arith.addf %75, %79 : vector<1x304xf32>
    %81 = vector.extract_strided_slice %25 {offsets = [0, 41], sizes = [1, 304], strides = [1, 1]} : vector<1x380xf32> to vector<1x304xf32>
    %c11 = arith.constant 11 : index
    %82 = memref.load %arg4[%c11] : memref<16xf32, #tpu.memory_space<smem>>
    %83 = vector.broadcast %82 : f32 to vector<1x304xf32>
    %84 = arith.mulf %81, %83 : vector<1x304xf32>
    %85 = arith.addf %80, %84 : vector<1x304xf32>
    %86 = vector.extract_strided_slice %25 {offsets = [0, 57], sizes = [1, 304], strides = [1, 1]} : vector<1x380xf32> to vector<1x304xf32>
    %c12 = arith.constant 12 : index
    %87 = memref.load %arg4[%c12] : memref<16xf32, #tpu.memory_space<smem>>
    %88 = vector.broadcast %87 : f32 to vector<1x304xf32>
    %89 = arith.mulf %86, %88 : vector<1x304xf32>
    %90 = arith.addf %85, %89 : vector<1x304xf32>
    %91 = vector.extract_strided_slice %25 {offsets = [0, 58], sizes = [1, 304], strides = [1, 1]} : vector<1x380xf32> to vector<1x304xf32>
    %c13 = arith.constant 13 : index
    %92 = memref.load %arg4[%c13] : memref<16xf32, #tpu.memory_space<smem>>
    %93 = vector.broadcast %92 : f32 to vector<1x304xf32>
    %94 = arith.mulf %91, %93 : vector<1x304xf32>
    %95 = arith.addf %90, %94 : vector<1x304xf32>
    %96 = vector.extract_strided_slice %25 {offsets = [0, 59], sizes = [1, 304], strides = [1, 1]} : vector<1x380xf32> to vector<1x304xf32>
    %c14 = arith.constant 14 : index
    %97 = memref.load %arg4[%c14] : memref<16xf32, #tpu.memory_space<smem>>
    %98 = vector.broadcast %97 : f32 to vector<1x304xf32>
    %99 = arith.mulf %96, %98 : vector<1x304xf32>
    %100 = arith.addf %95, %99 : vector<1x304xf32>
    %101 = vector.extract_strided_slice %25 {offsets = [0, 60], sizes = [1, 304], strides = [1, 1]} : vector<1x380xf32> to vector<1x304xf32>
    %c15 = arith.constant 15 : index
    %102 = memref.load %arg4[%c15] : memref<16xf32, #tpu.memory_space<smem>>
    %103 = vector.broadcast %102 : f32 to vector<1x304xf32>
    %104 = arith.mulf %101, %103 : vector<1x304xf32>
    %105 = arith.addf %100, %104 : vector<1x304xf32>
    %c0_9 = arith.constant 0 : index
    %c0_10 = arith.constant 0 : index
    %c0_11 = arith.constant 0 : index
    %106 = vector.load %arg6[%c0_9, %c0_10, %c0_11] : memref<1x1x304xf32, #tpu.memory_space<vmem>>, vector<1x1x304xf32>
    %107 = vector.shape_cast %106 : vector<1x1x304xf32> to vector<1x304xf32>
    %108 = vector.shape_cast %105 : vector<1x304xf32> to vector<1x1x304xf32>
    tpu.vector_store %arg6[%c0_9, %c0_10, %c0_11], %108 {strides = array<i32>} : memref<1x1x304xf32, #tpu.memory_space<vmem>>, vector<1x1x304xf32>,
    return
  }
  func.func @transform_0(%arg0: i32) -> (i32, i32, i32) {
    %c0_i32 = arith.constant 0 : i32
    %c0_i32_0 = arith.constant 0 : i32
    %c0_i32_1 = arith.constant 0 : i32
    return %arg0, %c0_i32, %c0_i32_0 : i32, i32, i32
  }
  func.func @transform_1(%arg0: i32) -> (i32, i32, i32) {
    %c0_i32 = arith.constant 0 : i32
    %c0_i32_0 = arith.constant 0 : i32
    %c0_i32_1 = arith.constant 0 : i32
    return %arg0, %c0_i32, %c0_i32_0 : i32, i32, i32
  }
  func.func @transform_2(%arg0: i32) -> (i32, i32) {
    %c0_i32 = arith.constant 0 : i32
    %c0_i32_0 = arith.constant 0 : i32
    %c0_i32_1 = arith.constant 0 : i32
    return %c0_i32, %c0_i32_0 : i32, i32
  }
  func.func @transform_3(%arg0: i32) -> i32 {
    %c0_i32 = arith.constant 0 : i32
    %c0_i32_0 = arith.constant 0 : i32
    return %c0_i32 : i32
  }
  func.func @transform_4(%arg0: i32) -> i32 {
    %c0_i32 = arith.constant 0 : i32
    %c0_i32_0 = arith.constant 0 : i32
    return %c0_i32 : i32
  }
  func.func @transform_5(%arg0: i32) -> (i32, i32, i32) {
    %c0_i32 = arith.constant 0 : i32
    %c0_i32_0 = arith.constant 0 : i32
    %c0_i32_1 = arith.constant 0 : i32
    return %arg0, %c0_i32, %c0_i32_0 : i32, i32, i32
  }
}

</mosaic_0001>

<llo_original>
// kernel: tpu_custom_call.1
$region0: #{tpu_custom_call.1}
  #allocation0 [shape = 'u32[]', space=smem, size = 0x4, offset = 0x4, fixed_abs, tag = 'smem constant byte address 0x4 - core index']
  #allocation1 [shape = 'u32[72,128]{1,0:T(1,128)}', space=vmem, size = 0x9000, scoped, tag = 'internal scratch']
  #allocation2 [shape = 'f32[1]{0:T(128)S(6)}', space=smem, size = 0x200, scoped, tag = 'scoped memory for tpu_custom_call.1']
  %s0 = inlined_call_operand.hbm [shape: bf16[2,64,361], index: 0, kind: input, shape index: {}]
  %s1 = inlined_call_operand.hbm [shape: f32[2,1,380], index: 1, kind: input, shape index: {}]
  %s2 = inlined_call_operand.hbm [shape: bf16[9,64], index: 2, kind: input, shape index: {}]
  %s3 = inlined_call_operand.vmem [shape: f32[16], index: 3, kind: input, shape index: {}]
  %s4 = inlined_call_operand.<no memory space> [shape: f32[1], index: 4, kind: input, shape index: {}]
  %s5 = inlined_call_operand.hbm [shape: f32[2,1,304], index: 5, kind: output, shape index: {}]
  %s6 = sld [smem:[#allocation0]]
  $region69: #{tpu_custom_call.1} parent=0
    _
  %s8 = ssub.s32 1, %s6
  %s9 = scalar_select 0, %s8, %s6
  %10 = sst [smem:[#allocation2]] %s4
  $region1: #{tpu_custom_call.1} parent=0
    #allocation3 [shape = 'u8[98304]{0}', space=vmem, size = 0x18000, scoped, tag = 'input window, operand 0']
    #allocation4 [shape = 's32[2]{0}', space=sflag, size = 0x8, scoped, tag = 'scoped memory for tpu_custom_call.1']
    #allocation5 [shape = 's32[2]{0}', space=sflag, size = 0x8, scoped, tag = 'scoped memory for tpu_custom_call.1']
    #allocation6 [shape = 's32[2]{0}', space=sflag, size = 0x8, scoped, tag = 'scoped memory for tpu_custom_call.1']
    #allocation7 [shape = 'u8[3072]{0}', space=vmem, size = 0xc00, scoped, tag = 'input window, operand 1']
    #allocation8 [shape = 's32[2]{0}', space=sflag, size = 0x8, scoped, tag = 'scoped memory for tpu_custom_call.1']
    #allocation9 [shape = 'u8[4096]{0}', space=vmem, size = 0x1000, scoped, tag = 'input window, operand 2, single buffered']
    #allocation10 [shape = 'u8[512]{0}', space=smem, size = 0x200, scoped, tag = 'input window, operand 3, single buffered']
    #allocation11 [shape = 'u8[3072]{0}', space=vmem, size = 0xc00, scoped, tag = 'output window, operand 0']
    %11 = vsyncpa [#allocation4], 0
    %s12 = scalar_lea.sflag [#allocation4], 1
    %13 = vsyncpa %s12, 0
    %14 = vsyncpa [#allocation8], 0
    %s15 = scalar_lea.sflag [#allocation8], 1
    %16 = vsyncpa %s15, 0
    %17 = vsyncpa [#allocation6], 0
    %18 = vsyncpa [#allocation5], 0
    %s19 = scalar_lea.sflag [#allocation5], 1
    %20 = vsyncpa %s19, 0
    loop: start=0, step=1, limit=4
    $region2: #{tpu_custom_call.1} parent=1 // loop_pre_header
      _
    $region3: #{tpu_custom_call.1} parent=1 // loop_header
      %s22 = sphi 0, %s26
      %p23 = scmp.ge.s32.totalorder %s22, 4
      %s32 = sphi 0, %s34
      %s35 = sphi 0, %s32
      %s36 = sphi 0, %s35
      %s52 = sphi 0, %s36
      %s58 = sphi 0, %s60
      %s61 = sphi 0, %s58
      %s62 = sphi 0, %s61
      %s78 = sphi 0, %s62
      %s82 = sphi 0, %s82
      %s84 = sphi 0, %s82
      %s85 = sphi 0, %s84
      %s99 = sphi 0, %s85
      %s103 = sphi 0, %s103
      %s105 = sphi 0, %s103
      %s106 = sphi 0, %s105
      %s120 = sphi 0, %s106
      %s124 = sphi 0, %s124
      %s126 = sphi 0, %s124
      %s127 = sphi 0, %s126
      %s141 = sphi 0, %s127
      %s147 = sphi 0, %s149
      %s150 = sphi 0, %s147
      %s151 = sphi 0, %s150
      %s167 = sphi 0, %s151
    $region4: #{tpu_custom_call.1} parent=1 // loop_header_branch
      %25 = sbr.rel (%p23) target = $region8
    $region5: #{tpu_custom_call.1} parent=1 // loop_body
      %s27 = ssub.s32 %s22, 1
      %s28 = ssub.s32 %s22, 2
      %s29 = sadd.s32 %s22, 1
      %s30 = ssub.s32 %s22, %s29
      %p31 = scmp.eq.s32.totalorder %s30, 0
      %s33 = sadd.s32 %s32, 1
      %s34 = scalar_select %p31, %s32, %s33
      %p37 = pneg %p31
      %p38 = scmp.eq.s32.totalorder %s22, 1
      %p39 = por %p37, %p38
      %p40 = scmp.ne.s32.totalorder %s32, %s35
      %p41 = scmp.eq.s32.totalorder %s22, 0
      %p42 = por %p40, %p41
      %p43 = scmp.ne.s32.totalorder %s32, %s35
      %p44 = scmp.eq.s32.totalorder %s27, 1
      %p45 = por %p43, %p44
      %p46 = scmp.ne.s32.totalorder %s35, %s36
      %p47 = scmp.eq.s32.totalorder %s27, 0
      %p48 = por %p46, %p47
      %p49 = scmp.ne.s32.totalorder %s35, %s36
      %p50 = scmp.eq.s32.totalorder %s28, 1
      %p51 = por %p49, %p50
      %p53 = scmp.ne.s32.totalorder %s36, %s52
      %p54 = scmp.eq.s32.totalorder %s28, 0
      %p55 = por %p53, %p54
      %s56 = ssub.s32 %s22, %s29
      %p57 = scmp.eq.s32.totalorder %s56, 0
      %s59 = sadd.s32 %s58, 1
      %s60 = scalar_select %p57, %s58, %s59
      %p63 = pneg %p57
      %p64 = scmp.eq.s32.totalorder %s22, 1
      %p65 = por %p63, %p64
      %p66 = scmp.ne.s32.totalorder %s58, %s61
      %p67 = scmp.eq.s32.totalorder %s22, 0
      %p68 = por %p66, %p67
      %p69 = scmp.ne.s32.totalorder %s58, %s61
      %p70 = scmp.eq.s32.totalorder %s27, 1
      %p71 = por %p69, %p70
      %p72 = scmp.ne.s32.totalorder %s61, %s62
      %p73 = scmp.eq.s32.totalorder %s27, 0
      %p74 = por %p72, %p73
      %p75 = scmp.ne.s32.totalorder %s61, %s62
      %p76 = scmp.eq.s32.totalorder %s28, 1
      %p77 = por %p75, %p76
      %p79 = scmp.ne.s32.totalorder %s62, %s78
      %p80 = scmp.eq.s32.totalorder %s28, 0
      %p81 = por %p79, %p80
      %s83 = sadd.s32 %s82, 1
      %p86 = scmp.eq.s32.totalorder %s22, 1
      %p87 = scmp.ne.s32.totalorder %s82, %s84
      %p88 = scmp.eq.s32.totalorder %s22, 0
      %p89 = por %p87, %p88
      %p90 = scmp.ne.s32.totalorder %s82, %s84
      %p91 = scmp.eq.s32.totalorder %s27, 1
      %p92 = por %p90, %p91
      %p93 = scmp.ne.s32.totalorder %s84, %s85
      %p94 = scmp.eq.s32.totalorder %s27, 0
      %p95 = por %p93, %p94
      %p96 = scmp.ne.s32.totalorder %s84, %s85
      %p97 = scmp.eq.s32.totalorder %s28, 1
      %p98 = por %p96, %p97
      %p100 = scmp.ne.s32.totalorder %s85, %s99
      %p101 = scmp.eq.s32.totalorder %s28, 0
      %p102 = por %p100, %p101
      %s104 = sadd.s32 %s103, 1
      %p107 = scmp.eq.s32.totalorder %s22, 1
      %p108 = scmp.ne.s32.totalorder %s103, %s105
      %p109 = scmp.eq.s32.totalorder %s22, 0
      %p110 = por %p108, %p109
      %p111 = scmp.ne.s32.totalorder %s103, %s105
      %p112 = scmp.eq.s32.totalorder %s27, 1
      %p113 = por %p111, %p112
      %p114 = scmp.ne.s32.totalorder %s105, %s106
      %p115 = scmp.eq.s32.totalorder %s27, 0
      %p116 = por %p114, %p115
      %p117 = scmp.ne.s32.totalorder %s105, %s106
      %p118 = scmp.eq.s32.totalorder %s28, 1
      %p119 = por %p117, %p118
      %p121 = scmp.ne.s32.totalorder %s106, %s120
      %p122 = scmp.eq.s32.totalorder %s28, 0
      %p123 = por %p121, %p122
      %s125 = sadd.s32 %s124, 1
      %p128 = scmp.eq.s32.totalorder %s22, 1
      %p129 = scmp.ne.s32.totalorder %s124, %s126
      %p130 = scmp.eq.s32.totalorder %s22, 0
      %p131 = por %p129, %p130
      %p132 = scmp.ne.s32.totalorder %s124, %s126
      %p133 = scmp.eq.s32.totalorder %s27, 1
      %p134 = por %p132, %p133
      %p135 = scmp.ne.s32.totalorder %s126, %s127
      %p136 = scmp.eq.s32.totalorder %s27, 0
      %p137 = por %p135, %p136
      %p138 = scmp.ne.s32.totalorder %s126, %s127
      %p139 = scmp.eq.s32.totalorder %s28, 1
      %p140 = por %p138, %p139
      %p142 = scmp.ne.s32.totalorder %s127, %s141
      %p143 = scmp.eq.s32.totalorder %s28, 0
      %p144 = por %p142, %p143
      %s145 = ssub.s32 %s22, %s29
      %p146 = scmp.eq.s32.totalorder %s145, 0
      %s148 = sadd.s32 %s147, 1
      %s149 = scalar_select %p146, %s147, %s148
      %p152 = pneg %p146
      %p153 = scmp.eq.s32.totalorder %s22, 1
      %p154 = por %p152, %p153
      %p155 = scmp.ne.s32.totalorder %s147, %s150
      %p156 = scmp.eq.s32.totalorder %s22, 0
      %p157 = por %p155, %p156
      %p158 = scmp.ne.s32.totalorder %s147, %s150
      %p159 = scmp.eq.s32.totalorder %s27, 1
      %p160 = por %p158, %p159
      %p161 = scmp.ne.s32.totalorder %s150, %s151
      %p162 = scmp.eq.s32.totalorder %s27, 0
      %p163 = por %p161, %p162
      %p164 = scmp.ne.s32.totalorder %s150, %s151
      %p165 = scmp.eq.s32.totalorder %s28, 1
      %p166 = por %p164, %p165
      %p168 = scmp.ne.s32.totalorder %s151, %s167
      %p169 = scmp.eq.s32.totalorder %s28, 0
      %p170 = por %p168, %p169
      %p171 = scmp.le.s32.totalorder 1, %s22
      %p172 = scmp.lt.s32.totalorder %s22, 3
      %p173 = pnand %p171, %p172
      %p174 = pneg %p173
      // Predicated region
      $region9: #{tpu_custom_call.1} parent=5 // pred_check
        _
      $region10: #{tpu_custom_call.1} parent=5 // pred_check_branch
        %176 = sbr.rel (%p173) target = $region12
      $region11: #{tpu_custom_call.1} parent=5 // pred_region
        %s177 = ssub.s32 %s22, 1
        // Predicated region
        $region13: #{tpu_custom_call.1} parent=11 // pred_check
          %p178 = pneg %p95
        $region14: #{tpu_custom_call.1} parent=11 // pred_check_branch
          %180 = sbr.rel (%p178) target = $region16
        $region15: #{tpu_custom_call.1} parent=11 // pred_region
          %182 = vsyncadd [#allocation8], 0
          %s183 = sshll.u32 %s2, 4
          %s184 = int_to_ptr.hbm [resolvable:$true] %s183
          %s185 = sshll.u32 [#allocation9], 4
          %s186 = int_to_ptr.vmem [resolvable:$true] %s185
          %191 = dma.hbm_to_vmem [thread:$0]  %s184, 128, %s186, [#allocation8], 64, 64, 4
        $region16: #{tpu_custom_call.1} parent=11 // pred_fallthru
          _
        // Predicated region
        $region17: #{tpu_custom_call.1} parent=11 // pred_check
          %p192 = pneg %p116
        $region18: #{tpu_custom_call.1} parent=11 // pred_check_branch
          %194 = sbr.rel (%p192) target = $region20
        $region19: #{tpu_custom_call.1} parent=11 // pred_region
          %196 = vsyncadd [#allocation6], 0
          %s198 = sshll.u32 %s3, 4
          %s199 = int_to_ptr.vmem [resolvable:$true] %s198
          %201 = dma.vmem_to_smem %s199, 16, [#allocation10], [#allocation6]
        $region20: #{tpu_custom_call.1} parent=11 // pred_fallthru
          _
        // Predicated region
        $region21: #{tpu_custom_call.1} parent=11 // pred_check
          %p202 = pneg %p137
        $region22: #{tpu_custom_call.1} parent=11 // pred_check_branch
          %204 = sbr.rel (%p202) target = $region24
        $region23: #{tpu_custom_call.1} parent=11 // pred_region
          _
        $region24: #{tpu_custom_call.1} parent=11 // pred_fallthru
          _
      $region12: #{tpu_custom_call.1} parent=5 // pred_fallthru
        _
      %p205 = scmp.lt.s32.totalorder %s22, 2
      // Predicated region
      $region25: #{tpu_custom_call.1} parent=5 // pred_check
        %p206 = pneg %p205
      $region26: #{tpu_custom_call.1} parent=5 // pred_check_branch
        %208 = sbr.rel (%p206) target = $region28
      $region27: #{tpu_custom_call.1} parent=5 // pred_region
        // Predicated region
        $region29: #{tpu_custom_call.1} parent=27 // pred_check
          %p209 = pneg %p42
        $region30: #{tpu_custom_call.1} parent=27 // pred_check_branch
          %211 = sbr.rel (%p209) target = $region32
        $region31: #{tpu_custom_call.1} parent=27 // pred_region
          %s212 = sand.u32 %s32, 1
          %s213 = scalar_lea.sflag [#allocation4], %s212
          %s214 = sand.u32 %s32, 1
          %s215 = smul.addr %s214, 96
          %s216 = scalar_lea.vmem [#allocation3], %s215
          %218 = vsyncadd %s213, 0
          %s219 = smul.addr %s22, 24
          %s220 = smul.addr %s219, 4
          %s221 = scalar_lea.hbm %s0, %s220
          %s222 = sshll.u32 %s221, 4
          %s223 = int_to_ptr.hbm [resolvable:$true] %s222
          %s224 = sshll.u32 %s216, 4
          %s225 = int_to_ptr.vmem [resolvable:$true] %s224
          %230 = dma.hbm_to_vmem [thread:$0]  %s223, 1536, %s225, %s213, 192, 192, 12
        $region32: #{tpu_custom_call.1} parent=27 // pred_fallthru
          _
        // Predicated region
        $region33: #{tpu_custom_call.1} parent=27 // pred_check
          %p231 = pneg %p68
        $region34: #{tpu_custom_call.1} parent=27 // pred_check_branch
          %233 = sbr.rel (%p231) target = $region36
        $region35: #{tpu_custom_call.1} parent=27 // pred_region
          %s234 = sand.u32 %s22, 1
          %s235 = scalar_lea.sflag [#allocation8], %s234
          %s236 = sand.u32 %s58, 1
          %s237 = smul.addr %s236, 3
          %s238 = scalar_lea.vmem [#allocation7], %s237
          %240 = vsyncadd %s235, 0
          %s241 = smul.addr %s22, 3
          %s242 = scalar_lea.hbm %s1, %s241
          %s244 = sshll.u32 %s242, 4
          %s245 = int_to_ptr.hbm [resolvable:$true] %s244
          %s246 = sshll.u32 %s238, 4
          %s247 = int_to_ptr.vmem [resolvable:$true] %s246
          %249 = dma.hbm_to_vmem [thread:$0]  %s245, 48, %s247, %s235
        $region36: #{tpu_custom_call.1} parent=27 // pred_fallthru
          _
      $region28: #{tpu_custom_call.1} parent=5 // pred_fallthru
        _
      %p250 = scmp.le.s32.totalorder 1, %s22
      %p251 = scmp.lt.s32.totalorder %s22, 3
      %p252 = pnand %p250, %p251
      %p253 = pneg %p252
      // Predicated region
      $region37: #{tpu_custom_call.1} parent=5 // pred_check
        _
      $region38: #{tpu_custom_call.1} parent=5 // pred_check_branch
        %255 = sbr.rel (%p252) target = $region40
      $region39: #{tpu_custom_call.1} parent=5 // pred_region
        %s256 = ssub.s32 %s22, 1
        %s257 = sand.u32 %s35, 1
        %s258 = scalar_lea.sflag [#allocation4], %s257
        %s259 = sand.u32 %s35, 1
        %s260 = smul.addr %s259, 96
        %s261 = scalar_lea.vmem [#allocation3], %s260
        // Predicated region
        $region41: #{tpu_custom_call.1} parent=39 // pred_check
          %p262 = pneg %p48
        $region42: #{tpu_custom_call.1} parent=39 // pred_check_branch
          %264 = sbr.rel (%p262) target = $region44
        $region43: #{tpu_custom_call.1} parent=39 // pred_region
          %266 = dma.done %s258, 1536
        $region44: #{tpu_custom_call.1} parent=39 // pred_fallthru
          _
        %s267 = sand.u32 %s27, 1
        %s268 = scalar_lea.sflag [#allocation8], %s267
        %s269 = sand.u32 %s61, 1
        %s270 = smul.addr %s269, 3
        %s271 = scalar_lea.vmem [#allocation7], %s270
        // Predicated region
        $region45: #{tpu_custom_call.1} parent=39 // pred_check
          %p272 = pneg %p74
        $region46: #{tpu_custom_call.1} parent=39 // pred_check_branch
          %274 = sbr.rel (%p272) target = $region48
        $region47: #{tpu_custom_call.1} parent=39 // pred_region
          %276 = dma.done %s268, 48
        $region48: #{tpu_custom_call.1} parent=39 // pred_fallthru
          _
        // Predicated region
        $region49: #{tpu_custom_call.1} parent=39 // pred_check
          %p277 = pneg %p95
        $region50: #{tpu_custom_call.1} parent=39 // pred_check_branch
          %279 = sbr.rel (%p277) target = $region52
        $region51: #{tpu_custom_call.1} parent=39 // pred_region
          %281 = dma.done [#allocation8], 128
        $region52: #{tpu_custom_call.1} parent=39 // pred_fallthru
          _
        // Predicated region
        $region53: #{tpu_custom_call.1} parent=39 // pred_check
          %p282 = pneg %p116
        $region54: #{tpu_custom_call.1} parent=39 // pred_check_branch
          %284 = sbr.rel (%p282) target = $region56
        $region55: #{tpu_custom_call.1} parent=39 // pred_region
          %286 = dma.done [#allocation6], 16
        $region56: #{tpu_custom_call.1} parent=39 // pred_fallthru
          _
        %287 = sfence
        %s288 = sand.u32 %s35, 1
        %s289 = scalar_lea.sflag [#allocation4], %s288
        %s290 = sand.u32 %s35, 1
        %s291 = smul.addr %s290, 96
        %s292 = scalar_lea.vmem [#allocation3], %s291
        %p293 = pneg %p48
        %p294 = pneg %p45
        %s295 = sand.u32 %s27, 1
        %s296 = scalar_lea.sflag [#allocation8], %s295
        %s297 = sand.u32 %s61, 1
        %s298 = smul.addr %s297, 3
        %s299 = scalar_lea.vmem [#allocation7], %s298
        %p300 = pneg %p74
        %p301 = pneg %p71
        %p302 = pneg %p95
        %p303 = pneg %p92
        %p304 = pneg %p116
        %p305 = pneg %p113
        %p306 = pneg %p137
        %p307 = pneg %p134
        %p308 = pneg %p163
        %p309 = pneg %p160
        %s310 = sand.u32 %s150, 1
        %s311 = scalar_lea.sflag [#allocation5], %s310
        %s312 = sand.u32 %s150, 1
        %s313 = smul.addr %s312, 3
        %s314 = scalar_lea.vmem [#allocation11], %s313
        %v316 = vld [vmem:[#allocation9] sm:$0xf]
        %v317 = vld [vmem:[#allocation9 + $0x4] sm:$0x1]
        %v318 = vld [vmem:[%s261] sm:$0xff]
        %v319 = vld [vmem:[%s261 + $0x8] sm:$0xf]
        %v320 = vld [vmem:[%s261 + $0xc] sm:$0xff]
        %v321 = vld [vmem:[%s261 + $0x14] sm:$0xf]
        %v322 = vld [vmem:[%s261 + $0x18] sm:$0xff]
        %v323 = vld [vmem:[%s261 + $0x20] sm:$0xf]
        %v324 = vld [vmem:[%s261 + $0x24] sm:$0xff]
        %v325 = vld [vmem:[%s261 + $0x2c] sm:$0xf]
        %v326 = vld [vmem:[%s261 + $0x30] sm:$0xff]
        %v327 = vld [vmem:[%s261 + $0x38] sm:$0xf]
        %v328 = vld [vmem:[%s261 + $0x3c] sm:$0xff]
        %v329 = vld [vmem:[%s261 + $0x44] sm:$0xf]
        %v330 = vld [vmem:[%s261 + $0x48] sm:$0xff]
        %v331 = vld [vmem:[%s261 + $0x50] sm:$0xf]
        %v332 = vld [vmem:[%s261 + $0x54] sm:$0xff]
        %v333 = vld [vmem:[%s261 + $0x5c] sm:$0xf]
        %v336 = vunpack.c.l.b16 %v316
        %v337 = vunpack.c.l.b16 %v317
        %v338 = vpack.c.b16 %v337, %v336
        %v355 = vunpack.c.l.b16 %v318
        %v356 = vunpack.c.h.b16 %v318
        %v357 = vunpack.c.l.b16 %v319
        %v358 = vunpack.c.l.b16 %v320
        %v359 = vunpack.c.h.b16 %v320
        %v360 = vunpack.c.l.b16 %v321
        %v361 = vunpack.c.l.b16 %v322
        %v362 = vunpack.c.h.b16 %v322
        %v363 = vunpack.c.l.b16 %v323
        %v364 = vunpack.c.l.b16 %v324
        %v365 = vunpack.c.h.b16 %v324
        %v366 = vunpack.c.l.b16 %v325
        %v367 = vunpack.c.l.b16 %v326
        %v368 = vunpack.c.h.b16 %v326
        %v369 = vunpack.c.l.b16 %v327
        %v370 = vunpack.c.l.b16 %v328
        %v371 = vunpack.c.h.b16 %v328
        %v372 = vunpack.c.l.b16 %v329
        %v373 = vunpack.c.l.b16 %v330
        %v374 = vunpack.c.h.b16 %v330
        %v375 = vunpack.c.l.b16 %v331
        %v376 = vunpack.c.l.b16 %v332
        %v377 = vunpack.c.h.b16 %v332
        %v378 = vunpack.c.l.b16 %v333
        %v379 = vpack.c.b16 %v358, %v355
        %v380 = vpack.c.b16 %v359, %v356
        %v381 = vpack.c.b16 %v360, %v357
        %v382 = vpack.c.b16 %v364, %v361
        %v383 = vpack.c.b16 %v365, %v362
        %v384 = vpack.c.b16 %v366, %v363
        %v385 = vpack.c.b16 %v370, %v367
        %v386 = vpack.c.b16 %v371, %v368
        %v387 = vpack.c.b16 %v372, %v369
        %v388 = vpack.c.b16 %v376, %v373
        %v389 = vpack.c.b16 %v377, %v374
        %v390 = vpack.c.b16 %v378, %v375
        %vm403 = vcmask 523264
        %v405 = vsel %vm403, %v338, 0
        %407 = vmatpush.bf16.msra.mxu0 0
        %408 = vmatpush.bf16.msra.mxu0 0
        %409 = vmatpush.bf16.msra.mxu0 0
        %410 = vmatpush.bf16.msra.mxu0 0
        %411 = vmatpush.bf16.msra.mxu0 %v388
        %412 = vmatpush.bf16.msra.mxu0 %v385
        %413 = vmatpush.bf16.msra.mxu0 %v382
        %414 = vmatpush.bf16.msra.mxu0 %v379
        %415 = vmatmul.bf16.gmra.mxu0 %v405
        %v416 = vpop.f32.mrf.mxu0
        %v417 = vadd.f32 0.0, %v416
        %v418 = vpop.f32.mrf.mxu0
        %v419 = vadd.f32 0.0, %v418
        %420 = vdwg.mxu0
        %421 = vmatpush.bf16.msra.mxu0 0
        %422 = vmatpush.bf16.msra.mxu0 0
        %423 = vmatpush.bf16.msra.mxu0 0
        %424 = vmatpush.bf16.msra.mxu0 0
        %425 = vmatpush.bf16.msra.mxu0 %v389
        %426 = vmatpush.bf16.msra.mxu0 %v386
        %427 = vmatpush.bf16.msra.mxu0 %v383
        %428 = vmatpush.bf16.msra.mxu0 %v380
        %429 = vmatmul.bf16.gmra.mxu0 %v405
        %v430 = vpop.f32.mrf.mxu0
        %v431 = vadd.f32 0.0, %v430
        %v432 = vpop.f32.mrf.mxu0
        %v433 = vadd.f32 0.0, %v432
        %434 = vdwg.mxu0
        %435 = vmatpush.bf16.msra.mxu0 0
        %436 = vmatpush.bf16.msra.mxu0 0
        %437 = vmatpush.bf16.msra.mxu0 0
        %438 = vmatpush.bf16.msra.mxu0 0
        %439 = vmatpush.bf16.msra.mxu0 %v390
        %440 = vmatpush.bf16.msra.mxu0 %v387
        %441 = vmatpush.bf16.msra.mxu0 %v384
        %442 = vmatpush.bf16.msra.mxu0 %v381
        %443 = vmatmul.bf16.gmra.mxu0 %v405
        %v444 = vpop.f32.mrf.mxu0
        %v445 = vadd.f32 0.0, %v444
        %v446 = vpop.f32.mrf.mxu0
        %v447 = vadd.f32 0.0, %v446
        %448 = vdwg.mxu0
        %s449 = sld [smem:[#allocation2]]
        %v450 = vstv %s449
        %v451 = vadd.f32 %v417, %v450
        %v452 = vadd.f32 %v431, %v450
        %v453 = vadd.f32 %v445, %v450
        %v457 = vrot.slane %v417, 1
        %v458 = vrot.slane %v431, 1
        %v459 = vrot.slane %v445, 1
        %460 = vrot.lane.b32.xlu0 %v457, 127
        %v461 = vpop.permute.xlu0 %460
        %462 = vrot.lane.b32.xlu0 %v458, 127
        %v463 = vpop.permute.xlu0 %462
        %464 = vrot.lane.b32.xlu0 %v459, 127
        %v465 = vpop.permute.xlu0 %464
        %vm466 = vcmask 1039360
        %v467 = vsel %vm466, %v461, %v463
        %v468 = vsel %vm466, %v463, %v465
        %v472 = vadd.f32 %v451, %v467
        %v473 = vadd.f32 %v452, %v468
        %v474 = vadd.f32 %v453, %v465
        %v475 = vrot.slane %v417, 2
        %v476 = vrot.slane %v431, 2
        %v477 = vrot.slane %v445, 2
        %478 = vrot.lane.b32.xlu0 %v475, 126
        %v479 = vpop.permute.xlu0 %478
        %480 = vrot.lane.b32.xlu0 %v476, 126
        %v481 = vpop.permute.xlu0 %480
        %482 = vrot.lane.b32.xlu0 %v477, 126
        %v483 = vpop.permute.xlu0 %482
        %vm484 = vcmask 1031168
        %v485 = vsel %vm484, %v479, %v481
        %v486 = vsel %vm484, %v481, %v483
        %v490 = vadd.f32 %v472, %v485
        %v491 = vadd.f32 %v473, %v486
        %v492 = vadd.f32 %v474, %v483
        %v493 = vrot.slane %v417, 3
        %v494 = vrot.slane %v431, 3
        %v495 = vrot.slane %v445, 3
        %496 = vrot.lane.b32.xlu0 %v493, 109
        %v497 = vpop.permute.xlu0 %496
        %498 = vrot.lane.b32.xlu0 %v494, 109
        %v499 = vpop.permute.xlu0 %498
        %500 = vrot.lane.b32.xlu0 %v495, 109
        %v501 = vpop.permute.xlu0 %500
        %vm502 = vcmask 891904
        %v503 = vsel %vm502, %v497, %v499
        %v504 = vsel %vm502, %v499, %v501
        %v508 = vadd.f32 %v490, %v503
        %v509 = vadd.f32 %v491, %v504
        %v510 = vadd.f32 %v492, %v501
        %v511 = vrot.slane %v417, 4
        %v512 = vrot.slane %v431, 4
        %v513 = vrot.slane %v445, 4
        %514 = vrot.lane.b32.xlu0 %v511, 108
        %v515 = vpop.permute.xlu0 %514
        %516 = vrot.lane.b32.xlu0 %v512, 108
        %v517 = vpop.permute.xlu0 %516
        %518 = vrot.lane.b32.xlu0 %v513, 108
        %v519 = vpop.permute.xlu0 %518
        %vm520 = vcmask 883712
        %v521 = vsel %vm520, %v515, %v517
        %v522 = vsel %vm520, %v517, %v519
        %v526 = vadd.f32 %v508, %v521
        %v527 = vadd.f32 %v509, %v522
        %v528 = vadd.f32 %v510, %v519
        %v529 = vrot.slane %v417, 5
        %v530 = vrot.slane %v431, 5
        %v531 = vrot.slane %v445, 5
        %532 = vrot.lane.b32.xlu0 %v529, 107
        %v533 = vpop.permute.xlu0 %532
        %534 = vrot.lane.b32.xlu0 %v530, 107
        %v535 = vpop.permute.xlu0 %534
        %536 = vrot.lane.b32.xlu0 %v531, 107
        %v537 = vpop.permute.xlu0 %536
        %vm538 = vcmask 875520
        %v539 = vsel %vm538, %v533, %v535
        %v540 = vsel %vm538, %v535, %v537
        %v544 = vadd.f32 %v526, %v539
        %v545 = vadd.f32 %v527, %v540
        %v546 = vadd.f32 %v528, %v537
        %v547 = vrot.slane %v417, 6
        %v548 = vrot.slane %v431, 6
        %v549 = vrot.slane %v445, 6
        %550 = vrot.lane.b32.xlu0 %v547, 90
        %v551 = vpop.permute.xlu0 %550
        %552 = vrot.lane.b32.xlu0 %v548, 90
        %v553 = vpop.permute.xlu0 %552
        %554 = vrot.lane.b32.xlu0 %v549, 90
        %v555 = vpop.permute.xlu0 %554
        %vm556 = vcmask 736256
        %v557 = vsel %vm556, %v551, %v553
        %v558 = vsel %vm556, %v553, %v555
        %v562 = vadd.f32 %v544, %v557
        %v563 = vadd.f32 %v545, %v558
        %v564 = vadd.f32 %v546, %v555
        %v565 = vrot.slane %v417, 7
        %v566 = vrot.slane %v431, 7
        %v567 = vrot.slane %v445, 7
        %568 = vrot.lane.b32.xlu0 %v565, 89
        %v569 = vpop.permute.xlu0 %568
        %570 = vrot.lane.b32.xlu0 %v566, 89
        %v571 = vpop.permute.xlu0 %570
        %572 = vrot.lane.b32.xlu0 %v567, 89
        %v573 = vpop.permute.xlu0 %572
        %vm574 = vcmask 728064
        %v575 = vsel %vm574, %v569, %v571
        %v576 = vsel %vm574, %v571, %v573
        %v580 = vadd.f32 %v562, %v575
        %v581 = vadd.f32 %v563, %v576
        %v582 = vadd.f32 %v564, %v573
        %586 = vrot.lane.b32.xlu0 %v419, 88
        %v587 = vpop.permute.xlu0 %586
        %588 = vrot.lane.b32.xlu0 %v433, 88
        %v589 = vpop.permute.xlu0 %588
        %590 = vrot.lane.b32.xlu0 %v447, 88
        %v591 = vpop.permute.xlu0 %590
        %vm592 = vcmask 719872
        %v593 = vsel %vm592, %v587, %v589
        %v594 = vsel %vm592, %v589, %v591
        %v598 = vadd.f32 %v580, %v593
        %v599 = vadd.f32 %v581, %v594
        %v600 = vadd.f32 %v582, %v591
        %v601 = vld [vmem:[%s271] sm:$0x7]
        %s602 = sld [smem:[#allocation10]]
        %v603 = vstv %s602
        %v604 = vmul.f32 %v601, %v603
        %v606 = vperm.slane %v604, 0
        %v607 = vperm.slane %v604, 1
        %v608 = vperm.slane %v604, 2
        %v612 = vadd.f32 %v598, %v606
        %v613 = vadd.f32 %v599, %v607
        %v614 = vadd.f32 %v600, %v608
        %s615 = sld [smem:[#allocation10 + $0x1]]
        %v616 = vstv %s615
        %v617 = vmul.f32 %v601, %v616
        %v619 = vperm.slane %v617, 0
        %v620 = vperm.slane %v617, 1
        %v621 = vperm.slane %v617, 2
        %622 = vrot.lane.b32.xlu0 %v619, 127
        %v623 = vpop.permute.xlu0 %622
        %624 = vrot.lane.b32.xlu0 %v620, 127
        %v625 = vpop.permute.xlu0 %624
        %626 = vrot.lane.b32.xlu0 %v621, 127
        %v627 = vpop.permute.xlu0 %626
        %v628 = vsel %vm466, %v623, %v625
        %v629 = vsel %vm466, %v625, %v627
        %v633 = vadd.f32 %v612, %v628
        %v634 = vadd.f32 %v613, %v629
        %v635 = vadd.f32 %v614, %v627
        %s636 = sld [smem:[#allocation10 + $0x2]]
        %v637 = vstv %s636
        %v638 = vmul.f32 %v601, %v637
        %v640 = vperm.slane %v638, 0
        %v641 = vperm.slane %v638, 1
        %v642 = vperm.slane %v638, 2
        %643 = vrot.lane.b32.xlu0 %v640, 126
        %v644 = vpop.permute.xlu0 %643
        %645 = vrot.lane.b32.xlu0 %v641, 126
        %v646 = vpop.permute.xlu0 %645
        %647 = vrot.lane.b32.xlu0 %v642, 126
        %v648 = vpop.permute.xlu0 %647
        %v649 = vsel %vm484, %v644, %v646
        %v650 = vsel %vm484, %v646, %v648
        %v654 = vadd.f32 %v633, %v649
        %v655 = vadd.f32 %v634, %v650
        %v656 = vadd.f32 %v635, %v648
        %s657 = sld [smem:[#allocation10 + $0x3]]
        %v658 = vstv %s657
        %v659 = vmul.f32 %v601, %v658
        %v661 = vperm.slane %v659, 0
        %v662 = vperm.slane %v659, 1
        %v663 = vperm.slane %v659, 2
        %664 = vrot.lane.b32.xlu0 %v661, 125
        %v665 = vpop.permute.xlu0 %664
        %666 = vrot.lane.b32.xlu0 %v662, 125
        %v667 = vpop.permute.xlu0 %666
        %668 = vrot.lane.b32.xlu0 %v663, 125
        %v669 = vpop.permute.xlu0 %668
        %vm670 = vcmask 1022976
        %v671 = vsel %vm670, %v665, %v667
        %v672 = vsel %vm670, %v667, %v669
        %v676 = vadd.f32 %v654, %v671
        %v677 = vadd.f32 %v655, %v672
        %v678 = vadd.f32 %v656, %v669
        %s679 = sld [smem:[#allocation10 + $0x4]]
        %v680 = vstv %s679
        %v681 = vmul.f32 %v601, %v680
        %v683 = vperm.slane %v681, 0
        %v684 = vperm.slane %v681, 1
        %v685 = vperm.slane %v681, 2
        %686 = vrot.lane.b32.xlu0 %v683, 109
        %v687 = vpop.permute.xlu0 %686
        %688 = vrot.lane.b32.xlu0 %v684, 109
        %v689 = vpop.permute.xlu0 %688
        %690 = vrot.lane.b32.xlu0 %v685, 109
        %v691 = vpop.permute.xlu0 %690
        %v692 = vsel %vm502, %v687, %v689
        %v693 = vsel %vm502, %v689, %v691
        %v697 = vadd.f32 %v676, %v692
        %v698 = vadd.f32 %v677, %v693
        %v699 = vadd.f32 %v678, %v691
        %s700 = sld [smem:[#allocation10 + $0x5]]
        %v701 = vstv %s700
        %v702 = vmul.f32 %v601, %v701
        %v704 = vperm.slane %v702, 0
        %v705 = vperm.slane %v702, 1
        %v706 = vperm.slane %v702, 2
        %707 = vrot.lane.b32.xlu0 %v704, 108
        %v708 = vpop.permute.xlu0 %707
        %709 = vrot.lane.b32.xlu0 %v705, 108
        %v710 = vpop.permute.xlu0 %709
        %711 = vrot.lane.b32.xlu0 %v706, 108
        %v712 = vpop.permute.xlu0 %711
        %v713 = vsel %vm520, %v708, %v710
        %v714 = vsel %vm520, %v710, %v712
        %v718 = vadd.f32 %v697, %v713
        %v719 = vadd.f32 %v698, %v714
        %v720 = vadd.f32 %v699, %v712
        %s721 = sld [smem:[#allocation10 + $0x6]]
        %v722 = vstv %s721
        %v723 = vmul.f32 %v601, %v722
        %v725 = vperm.slane %v723, 0
        %v726 = vperm.slane %v723, 1
        %v727 = vperm.slane %v723, 2
        %728 = vrot.lane.b32.xlu0 %v725, 107
        %v729 = vpop.permute.xlu0 %728
        %730 = vrot.lane.b32.xlu0 %v726, 107
        %v731 = vpop.permute.xlu0 %730
        %732 = vrot.lane.b32.xlu0 %v727, 107
        %v733 = vpop.permute.xlu0 %732
        %v734 = vsel %vm538, %v729, %v731
        %v735 = vsel %vm538, %v731, %v733
        %v739 = vadd.f32 %v718, %v734
        %v740 = vadd.f32 %v719, %v735
        %v741 = vadd.f32 %v720, %v733
        %s742 = sld [smem:[#allocation10 + $0x7]]
        %v743 = vstv %s742
        %v744 = vmul.f32 %v601, %v743
        %v746 = vperm.slane %v744, 0
        %v747 = vperm.slane %v744, 1
        %v748 = vperm.slane %v744, 2
        %749 = vrot.lane.b32.xlu0 %v746, 106
        %v750 = vpop.permute.xlu0 %749
        %751 = vrot.lane.b32.xlu0 %v747, 106
        %v752 = vpop.permute.xlu0 %751
        %753 = vrot.lane.b32.xlu0 %v748, 106
        %v754 = vpop.permute.xlu0 %753
        %vm755 = vcmask 867328
        %v756 = vsel %vm755, %v750, %v752
        %v757 = vsel %vm755, %v752, %v754
        %v761 = vadd.f32 %v739, %v756
        %v762 = vadd.f32 %v740, %v757
        %v763 = vadd.f32 %v741, %v754
        %s764 = sld [smem:[#allocation10 + $0x8]]
        %v765 = vstv %s764
        %v766 = vmul.f32 %v601, %v765
        %v768 = vperm.slane %v766, 0
        %v769 = vperm.slane %v766, 1
        %v770 = vperm.slane %v766, 2
        %771 = vrot.lane.b32.xlu0 %v768, 90
        %v772 = vpop.permute.xlu0 %771
        %773 = vrot.lane.b32.xlu0 %v769, 90
        %v774 = vpop.permute.xlu0 %773
        %775 = vrot.lane.b32.xlu0 %v770, 90
        %v776 = vpop.permute.xlu0 %775
        %v777 = vsel %vm556, %v772, %v774
        %v778 = vsel %vm556, %v774, %v776
        %v782 = vadd.f32 %v761, %v777
        %v783 = vadd.f32 %v762, %v778
        %v784 = vadd.f32 %v763, %v776
        %s785 = sld [smem:[#allocation10 + $0x9]]
        %v786 = vstv %s785
        %v787 = vmul.f32 %v601, %v786
        %v789 = vperm.slane %v787, 0
        %v790 = vperm.slane %v787, 1
        %v791 = vperm.slane %v787, 2
        %792 = vrot.lane.b32.xlu0 %v789, 89
        %v793 = vpop.permute.xlu0 %792
        %794 = vrot.lane.b32.xlu0 %v790, 89
        %v795 = vpop.permute.xlu0 %794
        %796 = vrot.lane.b32.xlu0 %v791, 89
        %v797 = vpop.permute.xlu0 %796
        %v798 = vsel %vm574, %v793, %v795
        %v799 = vsel %vm574, %v795, %v797
        %v803 = vadd.f32 %v782, %v798
        %v804 = vadd.f32 %v783, %v799
        %v805 = vadd.f32 %v784, %v797
        %s806 = sld [smem:[#allocation10 + $0xa]]
        %v807 = vstv %s806
        %v808 = vmul.f32 %v601, %v807
        %v810 = vperm.slane %v808, 0
        %v811 = vperm.slane %v808, 1
        %v812 = vperm.slane %v808, 2
        %813 = vrot.lane.b32.xlu0 %v810, 88
        %v814 = vpop.permute.xlu0 %813
        %815 = vrot.lane.b32.xlu0 %v811, 88
        %v816 = vpop.permute.xlu0 %815
        %817 = vrot.lane.b32.xlu0 %v812, 88
        %v818 = vpop.permute.xlu0 %817
        %v819 = vsel %vm592, %v814, %v816
        %v820 = vsel %vm592, %v816, %v818
        %v824 = vadd.f32 %v803, %v819
        %v825 = vadd.f32 %v804, %v820
        %v826 = vadd.f32 %v805, %v818
        %s827 = sld [smem:[#allocation10 + $0xb]]
        %v828 = vstv %s827
        %v829 = vmul.f32 %v601, %v828
        %v831 = vperm.slane %v829, 0
        %v832 = vperm.slane %v829, 1
        %v833 = vperm.slane %v829, 2
        %834 = vrot.lane.b32.xlu0 %v831, 87
        %v835 = vpop.permute.xlu0 %834
        %836 = vrot.lane.b32.xlu0 %v832, 87
        %v837 = vpop.permute.xlu0 %836
        %838 = vrot.lane.b32.xlu0 %v833, 87
        %v839 = vpop.permute.xlu0 %838
        %vm840 = vcmask 711680
        %v841 = vsel %vm840, %v835, %v837
        %v842 = vsel %vm840, %v837, %v839
        %v846 = vadd.f32 %v824, %v841
        %v847 = vadd.f32 %v825, %v842
        %v848 = vadd.f32 %v826, %v839
        %s849 = sld [smem:[#allocation10 + $0xc]]
        %v850 = vstv %s849
        %v851 = vmul.f32 %v601, %v850
        %v853 = vperm.slane %v851, 0
        %v854 = vperm.slane %v851, 1
        %v855 = vperm.slane %v851, 2
        %856 = vrot.lane.b32.xlu0 %v853, 71
        %v857 = vpop.permute.xlu0 %856
        %858 = vrot.lane.b32.xlu0 %v854, 71
        %v859 = vpop.permute.xlu0 %858
        %860 = vrot.lane.b32.xlu0 %v855, 71
        %v861 = vpop.permute.xlu0 %860
        %vm862 = vcmask 580608
        %v863 = vsel %vm862, %v857, %v859
        %v864 = vsel %vm862, %v859, %v861
        %v868 = vadd.f32 %v846, %v863
        %v869 = vadd.f32 %v847, %v864
        %v870 = vadd.f32 %v848, %v861
        %s871 = sld [smem:[#allocation10 + $0xd]]
        %v872 = vstv %s871
        %v873 = vmul.f32 %v601, %v872
        %v875 = vperm.slane %v873, 0
        %v876 = vperm.slane %v873, 1
        %v877 = vperm.slane %v873, 2
        %878 = vrot.lane.b32.xlu0 %v875, 70
        %v879 = vpop.permute.xlu0 %878
        %880 = vrot.lane.b32.xlu0 %v876, 70
        %v881 = vpop.permute.xlu0 %880
        %882 = vrot.lane.b32.xlu0 %v877, 70
        %v883 = vpop.permute.xlu0 %882
        %vm884 = vcmask 572416
        %v885 = vsel %vm884, %v879, %v881
        %v886 = vsel %vm884, %v881, %v883
        %v890 = vadd.f32 %v868, %v885
        %v891 = vadd.f32 %v869, %v886
        %v892 = vadd.f32 %v870, %v883
        %s893 = sld [smem:[#allocation10 + $0xe]]
        %v894 = vstv %s893
        %v895 = vmul.f32 %v601, %v894
        %v897 = vperm.slane %v895, 0
        %v898 = vperm.slane %v895, 1
        %v899 = vperm.slane %v895, 2
        %900 = vrot.lane.b32.xlu0 %v897, 69
        %v901 = vpop.permute.xlu0 %900
        %902 = vrot.lane.b32.xlu0 %v898, 69
        %v903 = vpop.permute.xlu0 %902
        %904 = vrot.lane.b32.xlu0 %v899, 69
        %v905 = vpop.permute.xlu0 %904
        %vm906 = vcmask 564224
        %v907 = vsel %vm906, %v901, %v903
        %v908 = vsel %vm906, %v903, %v905
        %v912 = vadd.f32 %v890, %v907
        %v913 = vadd.f32 %v891, %v908
        %v914 = vadd.f32 %v892, %v905
        %s915 = sld [smem:[#allocation10 + $0xf]]
        %v916 = vstv %s915
        %v917 = vmul.f32 %v601, %v916
        %v919 = vperm.slane %v917, 0
        %v920 = vperm.slane %v917, 1
        %v921 = vperm.slane %v917, 2
        %922 = vrot.lane.b32.xlu0 %v919, 68
        %v923 = vpop.permute.xlu0 %922
        %924 = vrot.lane.b32.xlu0 %v920, 68
        %v925 = vpop.permute.xlu0 %924
        %926 = vrot.lane.b32.xlu0 %v921, 68
        %v927 = vpop.permute.xlu0 %926
        %vm928 = vcmask 556032
        %v929 = vsel %vm928, %v923, %v925
        %v930 = vsel %vm928, %v925, %v927
        %v934 = vadd.f32 %v912, %v929
        %v935 = vadd.f32 %v913, %v930
        %v936 = vadd.f32 %v914, %v927
        %v940 = vrot.slane %v935, 7
        %v941 = vrot.slane %v936, 6
        %vm942 = vcmask 1040384
        %v943 = vsel %vm942, %v934, %v940
        %vm944 = vcmask 1041408
        %v945 = vsel %vm944, %v943, %v941
        %v947 = vlaneseq
        %vm948 = vcmp.ge.s32.totalorder %v947, 0
        %vm949 = vcmp.lt.s32.totalorder %v947, 304
        %vm950 = vmand %vm948, %vm949
        %951 = vst.msk [vmem:[%s314] sm:$0x7] %vm950, %v945
        %s952 = sand.u32 %s150, 1
        %s953 = scalar_lea.sflag [#allocation5], %s952
        %s954 = sand.u32 %s150, 1
        %s955 = smul.addr %s954, 3
        %s956 = scalar_lea.vmem [#allocation11], %s955
        // Predicated region
        $region57: #{tpu_custom_call.1} parent=39 // pred_check
          %p957 = pneg %p160
        $region58: #{tpu_custom_call.1} parent=39 // pred_check_branch
          %959 = sbr.rel (%p957) target = $region60
        $region59: #{tpu_custom_call.1} parent=39 // pred_region
          %961 = vsyncadd %s953, 0
          %s962 = smul.addr %s27, 3
          %s963 = scalar_lea.hbm %s5, %s962
          %s965 = sshll.u32 %s956, 4
          %s966 = int_to_ptr.vmem [resolvable:$true] %s965
          %s967 = sshll.u32 %s963, 4
          %s968 = int_to_ptr.hbm [resolvable:$true] %s967
          %970 = dma.vmem_to_hbm [thread:$0]  %s966, 48, %s968, %s953
        $region60: #{tpu_custom_call.1} parent=39 // pred_fallthru
          _
      $region40: #{tpu_custom_call.1} parent=5 // pred_fallthru
        _
      %p971 = scmp.le.s32.totalorder 2, %s22
      // Predicated region
      $region61: #{tpu_custom_call.1} parent=5 // pred_check
        %p972 = pneg %p971
      $region62: #{tpu_custom_call.1} parent=5 // pred_check_branch
        %974 = sbr.rel (%p972) target = $region64
      $region63: #{tpu_custom_call.1} parent=5 // pred_region
        %s975 = ssub.s32 %s22, 2
        // Predicated region
        $region65: #{tpu_custom_call.1} parent=63 // pred_check
          %p976 = pneg %p166
        $region66: #{tpu_custom_call.1} parent=63 // pred_check_branch
          %978 = sbr.rel (%p976) target = $region68
        $region67: #{tpu_custom_call.1} parent=63 // pred_region
          %s979 = sand.u32 %s151, 1
          %s980 = scalar_lea.sflag [#allocation5], %s979
          %s981 = sand.u32 %s151, 1
          %s982 = smul.addr %s981, 3
          %s983 = scalar_lea.vmem [#allocation11], %s982
          %985 = dma.done %s980, 48
        $region68: #{tpu_custom_call.1} parent=63 // pred_fallthru
          _
      $region64: #{tpu_custom_call.1} parent=5 // pred_fallthru
        _
    $region6: #{tpu_custom_call.1} parent=1 // loop_footer
      %s26 = sadd.s32 1, %s22
    $region7: #{tpu_custom_call.1} parent=1 // loop_footer_branch
      %21 = sbr.rel target = $region3
    $region8: #{tpu_custom_call.1} parent=1 // loop_exit
      _
    %986 = vsyncpa [#allocation4], 1
    %s987 = scalar_lea.sflag [#allocation4], 1
    %988 = vsyncpa %s987, 1
    %989 = vsyncpa [#allocation8], 1
    %s990 = scalar_lea.sflag [#allocation8], 1
    %991 = vsyncpa %s990, 1
    %992 = vsyncpa [#allocation5], 1
    %s993 = scalar_lea.sflag [#allocation5], 1
    %994 = vsyncpa %s993, 1
    %995 = vsyncpa [#allocation6], 1
    %s996 = scalar_lea.sflag [#allocation6], 1
    %997 = vsyncpa %s996, 1

</llo_original>
